<compile_context>
chip_gen: v7x
topology: tpu7x:2x2x1
jax: 0.10.0
libtpu: 0.0.40
codegen_flags: <defaults>
</compile_context>

<pallas_src>
import jax
import jax.numpy as jnp
from jax.experimental import pallas as pl
from jax.experimental.pallas import tpu as pltpu


def _round_up(x, m):
    return ((x + m - 1) // m) * m


def _vmem_limit_bytes():
    """Generation-aware VMEM limit: half of physical VMEM.

    ~32 MiB on v7x (64 MiB physical), ~64 MiB on v5e/v6e (128 MiB physical).
    """
    cap = None
    try:
        cap = getattr(pltpu.get_tpu_info(), "vmem_capacity_bytes", None)
    except Exception:
        cap = None
    if not cap:
        cap = 64 * 1024 * 1024          # conservative fallback: v7x physical
    return int(min(cap // 2, 96 * 1024 * 1024))


def _choose_tm(m, bytes_per_row, budget):
    """Rows of the flattened (b, s) axis per grid step.

    Largest multiple of 8 that fits the per-step VMEM budget, adjusted so the
    grid step count is even (>= 2) whenever there is enough work: the 1-D
    grid is marked "parallel" and an even count keeps both v7x TensorCores
    busy (harmless on the single-TC v5e/v6e).
    """
    max_tm = max(8, min(budget // max(1, bytes_per_row), 2048))
    max_tm = max(8, (max_tm // 8) * 8)
    tm = min(max_tm, _round_up(m, 8))
    steps = -(-m // tm)
    if steps == 1 and m >= 16:
        steps = 2
    elif steps > 1 and steps % 2 == 1:
        steps += 1
    tm = min(max_tm, _round_up(-(-m // steps), 8))
    return max(tm, 8)


def _fused_operator(supports, weight, *, order, include_self, n_nodes, c_in):
    """Fold the diffusion (all supports, all hops) + 1x1 conv into one map.

    Returns K of shape (C*N, Co*N), f32, with
      K[c*N + v, co*N + w] = sum_f W[co, f*C + c] * Op_f[w, v],
    Op_0 = I (if include_self), Op_{1 + l*order + (k-1)} = A_l^k, matching the
    channel-concatenation order of the PyTorch module.
    """
    n, c = n_nodes, c_in
    co = weight.shape[0]
    ops = [jnp.eye(n, dtype=jnp.float32)] if include_self else []
    for a in supports:
        a32 = a.astype(jnp.float32)
        ak = a32
        for k in range(order):
            if k > 0:
                ak = ak @ a32
            ops.append(ak)
    ops = jnp.stack(ops)                                          # (F, N, N)
    w3 = weight.astype(jnp.float32).reshape(co, ops.shape[0], c)  # (Co, F, C)
    k4 = jnp.einsum('ofc,fwv->cvow', w3, ops)                     # (C,N,Co,N)
    return k4.reshape(c * n, co * n)


def _fused_kernel(x_ref, k_ref, b_ref, o_ref):
    """One grid step: (TM, CNp) @ (CNp, CoNp) on the MXU, f32 accumulation,
    single bias add + cast at the lane-dense store."""
    acc = jnp.dot(x_ref[...], k_ref[...], preferred_element_type=jnp.float32)
    o_ref[...] = (acc + b_ref[...]).astype(o_ref.dtype)


def dense_graph_conv_order_k(x, supports, weight, bias, *, order=2,
                             include_self=True,
                             compute_dtype=jnp.bfloat16):
    """x: (B, C, N, S); supports: list of (N, N); weight: (Co, F*C);
    bias: (Co,).  Returns (B, Co, N, S), matching the PyTorch module
    (channel_last=False, 4-D input)."""
    B, C, N, S = x.shape
    L = len(supports)
    Co = weight.shape[0]
    F = order * L + (1 if include_self else 0)
    assert weight.shape == (Co, F * C)

    out_dtype = x.dtype
    cdt = jnp.dtype(compute_dtype)
    cdt_is = cdt.itemsize
    out_is = jnp.dtype(out_dtype).itemsize

    M = B * S
    CN = C * N
    CoN = Co * N
    CNp = _round_up(CN, 8)            # contraction dim, sublanes of K
    CoNp = _round_up(CoN, 128)        # lane-dense output blocks

    # ---- host-side operator fusion (f32 build, single cast) -------------
    k_op = _fused_operator(supports, weight, order=order,
                           include_self=include_self, n_nodes=N, c_in=C)
    k_op = jnp.pad(k_op, ((0, CNp - CN), (0, CoNp - CoN))).astype(cdt)
    b_row = jnp.repeat(bias.astype(jnp.float32), N)[None, :]      # (1, Co*N)
    b_row = jnp.pad(b_row, ((0, 0), (0, CoNp - CoN)))

    # ---- activations to node-last, flattened (b, s) rows ----------------
    x2 = jnp.transpose(x, (0, 3, 1, 2)).reshape(M, CN).astype(cdt)
    if CNp != CN:
        x2 = jnp.pad(x2, ((0, 0), (0, CNp - CN)))

    # ---- VMEM-aware tiling over the flattened (b, s) axis ---------------
    vmem_limit = _vmem_limit_bytes()
    resident = 2 * (CNp * CoNp * cdt_is + CoNp * 4)     # K + bias (x2 bufs)
    bytes_per_row = 2 * (CNp * cdt_is + CoNp * out_is)  # double-buffered io
    budget = int(0.75 * vmem_limit) - resident
    TM = _choose_tm(M, bytes_per_row, budget)
    Mp = _round_up(M, TM)
    if Mp != M:
        x2 = jnp.pad(x2, ((0, Mp - M), (0, 0)))
    steps = Mp // TM

    flops = 2 * Mp * CNp * CoNp
    bytes_accessed = (x2.size * cdt_is + k_op.size * cdt_is
                      + b_row.size * 4 + Mp * CoNp * out_is)

    out = pl.pallas_call(
        _fused_kernel,
        out_shape=jax.ShapeDtypeStruct((Mp, CoNp), out_dtype),
        grid_spec=pltpu.PrefetchScalarGridSpec(
            num_scalar_prefetch=0,
            grid=(steps,),
            in_specs=[
                pl.BlockSpec((TM, CNp), lambda i: (i, 0)),     # x rows tile
                pl.BlockSpec((CNp, CoNp), lambda i: (0, 0)),   # fused operator
                pl.BlockSpec((1, CoNp), lambda i: (0, 0)),     # bias row (f32)
            ],
            out_specs=pl.BlockSpec((TM, CoNp), lambda i: (i, 0)),
        ),
        compiler_params=pltpu.CompilerParams(
            dimension_semantics=("parallel",),
            vmem_limit_bytes=vmem_limit),
        cost_estimate=pl.CostEstimate(flops=flops, transcendentals=0,
                                      bytes_accessed=bytes_accessed),
    )(x2, k_op, b_row)

    # (Mp, CoNp) -> (B, S, Co, N) -> (B, Co, N, S)
    y = out[:M, :CoN].reshape(B, S, Co, N)
    return jnp.transpose(y, (0, 2, 3, 1))


def _reference(x, supports, weight, bias, *, order, include_self):
    """Pure-JAX transcription of the PyTorch forward for verification."""
    out = [x] if include_self else []
    for a in supports:
        x1 = x
        for _ in range(order):
            x1 = jnp.einsum('ncvl,wv->ncwl', x1, a)
            out.append(x1)
    cat = jnp.concatenate(out, axis=1)
    y = jnp.einsum('oi,bivl->bovl', weight, cat)
    return y + bias[None, :, None, None]


if __name__ == "__main__":
    # Module config: input_size=4, output_size=8, support_len=3, order=2,
    # include_self=True, channel_last=False, 4-D input.
    B, C_in, N, S = 2, 4, 16, 8
    support_len, order, include_self = 3, 2, True
    C_out = 8
    Ci_total = (order * support_len + (1 if include_self else 0)) * C_in

    key = jax.random.PRNGKey(0)
    kx, ka, kw, kb = jax.random.split(key, 4)

    x = jax.random.normal(kx, (B, C_in, N, S), dtype=jnp.float32)

    # Synthetic row-normalized support operators (as compute_support gives).
    adj_raw = jax.random.uniform(ka, (support_len, N, N), dtype=jnp.float32)
    supports = [a / (a.sum(1, keepdims=True) + 1e-8) for a in adj_raw]

    # torch Conv2d weight (Co, Ci, 1, 1) -> (Co, Ci), bias (Co,).
    weight = 0.1 * jax.random.normal(kw, (C_out, Ci_total), dtype=jnp.float32)
    bias = 0.1 * jax.random.normal(kb, (C_out,), dtype=jnp.float32)

    y_ref = _reference(x, supports, weight, bias,
                       order=order, include_self=include_self)

    # f32 opt-in path (exact module semantics, tight tolerance).
    y32 = dense_graph_conv_order_k(x, supports, weight, bias,
                                   order=order, include_self=include_self,
                                   compute_dtype=jnp.float32)
    y32 = jax.block_until_ready(y32)
    assert y32.shape == (B, C_out, N, S)
    assert jnp.allclose(y32, y_ref, atol=1e-4, rtol=1e-4)

    # Default path: bf16 MXU inputs, f32 accumulation (operator fused in f32
    # and cast once, so rounding does not compound over hops).
    y = dense_graph_conv_order_k(x, supports, weight, bias,
                                 order=order, include_self=include_self)
    y = jax.block_until_ready(y)
    assert y.shape == (B, C_out, N, S)
    assert jnp.allclose(y, y_ref, atol=1e-1, rtol=1e-1)

    print("KERNEL_OK")
</pallas_src>

<mosaic_0001>
module attributes {stable_mosaic.version = 11 : i64} {
  func.func @_fused_kernel(%arg0: i32, %arg1: memref<8x64xf32, #tpu.memory_space<vmem>>, %arg2: memref<64x128xf32, #tpu.memory_space<vmem>>, %arg3: memref<1x128xf32, #tpu.memory_space<vmem>>, %arg4: memref<8x128xf32, #tpu.memory_space<vmem>>) attributes {dimension_semantics = [#tpu.dimension_semantics<parallel>], iteration_bounds = array<i64: 2>, scalar_prefetch = 0 : i64, scratch_operands = 0 : i64, tpu.core_type = #tpu.core_type<tc>, window_params = [{transform_indices = @transform_0, window_bounds = array<i64: 8, 64>}, {pipeline_mode = #tpu.pipeline_mode<synchronous>, transform_indices = @transform_1, window_bounds = array<i64: 64, 128>}, {pipeline_mode = #tpu.pipeline_mode<synchronous>, transform_indices = @transform_2, window_bounds = array<i64: 1, 128>}, {transform_indices = @transform_3, window_bounds = array<i64: 8, 128>}]} {
    %c0 = arith.constant 0 : index
    %c0_0 = arith.constant 0 : index
    %0 = vector.load %arg1[%c0, %c0_0] : memref<8x64xf32, #tpu.memory_space<vmem>>, vector<8x64xf32>
    %c0_1 = arith.constant 0 : index
    %c0_2 = arith.constant 0 : index
    %1 = vector.load %arg2[%c0_1, %c0_2] : memref<64x128xf32, #tpu.memory_space<vmem>>, vector<64x128xf32>
    %cst = arith.constant dense<0.000000e+00> : vector<8x128xf32>
    %2 = tpu.matmul %0, %1, %cst {dimension_numbers = #tpu.dot_dimension_numbers<[1], [0], [0], [1], [0, 0, 1, 1], [], []>} : vector<8x64xf32>, vector<64x128xf32>, vector<8x128xf32> -> vector<8x128xf32>
    %c0_3 = arith.constant 0 : index
    %c0_4 = arith.constant 0 : index
    %3 = vector.load %arg3[%c0_3, %c0_4] : memref<1x128xf32, #tpu.memory_space<vmem>>, vector<1x128xf32>
    %4 = vector.broadcast %3 : vector<1x128xf32> to vector<8x128xf32>
    %5 = arith.addf %2, %4 : vector<8x128xf32>
    %c0_5 = arith.constant 0 : index
    %c0_6 = arith.constant 0 : index
    %6 = vector.load %arg4[%c0_5, %c0_6] : memref<8x128xf32, #tpu.memory_space<vmem>>, vector<8x128xf32>
    tpu.vector_store %arg4[%c0_5, %c0_6], %5 {strides = array<i32>} : memref<8x128xf32, #tpu.memory_space<vmem>>, vector<8x128xf32>,
    return
  }
  func.func @transform_0(%arg0: i32) -> (i32, i32) {
    %c0_i32 = arith.constant 0 : i32
    %c0_i32_0 = arith.constant 0 : i32
    return %arg0, %c0_i32 : i32, i32
  }
  func.func @transform_1(%arg0: i32) -> (i32, i32) {
    %c0_i32 = arith.constant 0 : i32
    %c0_i32_0 = arith.constant 0 : i32
    %c0_i32_1 = arith.constant 0 : i32
    return %c0_i32, %c0_i32_0 : i32, i32
  }
  func.func @transform_2(%arg0: i32) -> (i32, i32) {
    %c0_i32 = arith.constant 0 : i32
    %c0_i32_0 = arith.constant 0 : i32
    %c0_i32_1 = arith.constant 0 : i32
    return %c0_i32, %c0_i32_0 : i32, i32
  }
  func.func @transform_3(%arg0: i32) -> (i32, i32) {
    %c0_i32 = arith.constant 0 : i32
    %c0_i32_0 = arith.constant 0 : i32
    return %arg0, %c0_i32 : i32, i32
  }
}

</mosaic_0001>

<llo_original>
// kernel: tpu_custom_call.1
$region0: #{tpu_custom_call.1}
  #allocation0 [shape = 'u32[]', space=smem, size = 0x4, offset = 0x4, fixed_abs, tag = 'smem constant byte address 0x4 - core index']
  #allocation1 [shape = 'u32[144,128]{1,0:T(1,128)}', space=vmem, size = 0x12000, scoped, tag = 'internal scratch']
  %s0 = inlined_call_operand.hbm [shape: f32[16,64], index: 0, kind: input, shape index: {}]
  %s1 = inlined_call_operand.hbm [shape: f32[64,128], index: 1, kind: input, shape index: {}]
  %s2 = inlined_call_operand.vmem [shape: f32[1,128], index: 2, kind: input, shape index: {}]
  %s3 = inlined_call_operand.hbm [shape: f32[16,128], index: 3, kind: output, shape index: {}]
  %s4 = sld [smem:[#allocation0]]
  $region53: #{tpu_custom_call.1} parent=0
    _
  %s6 = ssub.s32 1, %s4
  %s7 = scalar_select 0, %s6, %s4
  $region1: #{tpu_custom_call.1} parent=0
    #allocation2 [shape = 'u8[8192]{0}', space=vmem, size = 0x2000, scoped, tag = 'input window, operand 0']
    #allocation3 [shape = 's32[2]{0}', space=sflag, size = 0x8, scoped, tag = 'scoped memory for tpu_custom_call.1']
    #allocation4 [shape = 's32[2]{0}', space=sflag, size = 0x8, scoped, tag = 'scoped memory for tpu_custom_call.1']
    #allocation5 [shape = 'u8[32768]{0}', space=vmem, size = 0x8000, scoped, tag = 'input window, operand 1, single buffered']
    #allocation6 [shape = 's32[1]{0}', space=sflag, size = 0x4, scoped, tag = 'scoped memory for tpu_custom_call.1']
    #allocation7 [shape = 'u8[8192]{0}', space=vmem, size = 0x2000, scoped, tag = 'output window, operand 0']
    %8 = vsyncpa [#allocation3], 0
    %s9 = scalar_lea.sflag [#allocation3], 1
    %10 = vsyncpa %s9, 0
    %11 = vsyncpa [#allocation6], 0
    %12 = vsyncpa [#allocation4], 0
    %s13 = scalar_lea.sflag [#allocation4], 1
    %14 = vsyncpa %s13, 0
    loop: start=0, step=1, limit=4
    $region2: #{tpu_custom_call.1} parent=1 // loop_pre_header
      _
    $region3: #{tpu_custom_call.1} parent=1 // loop_header
      %s16 = sphi 0, %s20
      %p17 = scmp.ge.s32.totalorder %s16, 4
      %s26 = sphi 0, %s28
      %s29 = sphi 0, %s26
      %s30 = sphi 0, %s29
      %s46 = sphi 0, %s30
      %s50 = sphi 0, %s50
      %s52 = sphi 0, %s50
      %s53 = sphi 0, %s52
      %s67 = sphi 0, %s53
      %s71 = sphi 0, %s71
      %s73 = sphi 0, %s71
      %s74 = sphi 0, %s73
      %s88 = sphi 0, %s74
      %s94 = sphi 0, %s96
      %s97 = sphi 0, %s94
      %s98 = sphi 0, %s97
      %s114 = sphi 0, %s98
    $region4: #{tpu_custom_call.1} parent=1 // loop_header_branch
      %19 = sbr.rel (%p17) target = $region8
    $region5: #{tpu_custom_call.1} parent=1 // loop_body
      %s21 = ssub.s32 %s16, 1
      %s22 = ssub.s32 %s16, 2
      %s23 = sadd.s32 %s16, 1
      %s24 = ssub.s32 %s16, %s23
      %p25 = scmp.eq.s32.totalorder %s24, 0
      %s27 = sadd.s32 %s26, 1
      %s28 = scalar_select %p25, %s26, %s27
      %p31 = pneg %p25
      %p32 = scmp.eq.s32.totalorder %s16, 1
      %p33 = por %p31, %p32
      %p34 = scmp.ne.s32.totalorder %s26, %s29
      %p35 = scmp.eq.s32.totalorder %s16, 0
      %p36 = por %p34, %p35
      %p37 = scmp.ne.s32.totalorder %s26, %s29
      %p38 = scmp.eq.s32.totalorder %s21, 1
      %p39 = por %p37, %p38
      %p40 = scmp.ne.s32.totalorder %s29, %s30
      %p41 = scmp.eq.s32.totalorder %s21, 0
      %p42 = por %p40, %p41
      %p43 = scmp.ne.s32.totalorder %s29, %s30
      %p44 = scmp.eq.s32.totalorder %s22, 1
      %p45 = por %p43, %p44
      %p47 = scmp.ne.s32.totalorder %s30, %s46
      %p48 = scmp.eq.s32.totalorder %s22, 0
      %p49 = por %p47, %p48
      %s51 = sadd.s32 %s50, 1
      %p54 = scmp.eq.s32.totalorder %s16, 1
      %p55 = scmp.ne.s32.totalorder %s50, %s52
      %p56 = scmp.eq.s32.totalorder %s16, 0
      %p57 = por %p55, %p56
      %p58 = scmp.ne.s32.totalorder %s50, %s52
      %p59 = scmp.eq.s32.totalorder %s21, 1
      %p60 = por %p58, %p59
      %p61 = scmp.ne.s32.totalorder %s52, %s53
      %p62 = scmp.eq.s32.totalorder %s21, 0
      %p63 = por %p61, %p62
      %p64 = scmp.ne.s32.totalorder %s52, %s53
      %p65 = scmp.eq.s32.totalorder %s22, 1
      %p66 = por %p64, %p65
      %p68 = scmp.ne.s32.totalorder %s53, %s67
      %p69 = scmp.eq.s32.totalorder %s22, 0
      %p70 = por %p68, %p69
      %s72 = sadd.s32 %s71, 1
      %p75 = scmp.eq.s32.totalorder %s16, 1
      %p76 = scmp.ne.s32.totalorder %s71, %s73
      %p77 = scmp.eq.s32.totalorder %s16, 0
      %p78 = por %p76, %p77
      %p79 = scmp.ne.s32.totalorder %s71, %s73
      %p80 = scmp.eq.s32.totalorder %s21, 1
      %p81 = por %p79, %p80
      %p82 = scmp.ne.s32.totalorder %s73, %s74
      %p83 = scmp.eq.s32.totalorder %s21, 0
      %p84 = por %p82, %p83
      %p85 = scmp.ne.s32.totalorder %s73, %s74
      %p86 = scmp.eq.s32.totalorder %s22, 1
      %p87 = por %p85, %p86
      %p89 = scmp.ne.s32.totalorder %s74, %s88
      %p90 = scmp.eq.s32.totalorder %s22, 0
      %p91 = por %p89, %p90
      %s92 = ssub.s32 %s16, %s23
      %p93 = scmp.eq.s32.totalorder %s92, 0
      %s95 = sadd.s32 %s94, 1
      %s96 = scalar_select %p93, %s94, %s95
      %p99 = pneg %p93
      %p100 = scmp.eq.s32.totalorder %s16, 1
      %p101 = por %p99, %p100
      %p102 = scmp.ne.s32.totalorder %s94, %s97
      %p103 = scmp.eq.s32.totalorder %s16, 0
      %p104 = por %p102, %p103
      %p105 = scmp.ne.s32.totalorder %s94, %s97
      %p106 = scmp.eq.s32.totalorder %s21, 1
      %p107 = por %p105, %p106
      %p108 = scmp.ne.s32.totalorder %s97, %s98
      %p109 = scmp.eq.s32.totalorder %s21, 0
      %p110 = por %p108, %p109
      %p111 = scmp.ne.s32.totalorder %s97, %s98
      %p112 = scmp.eq.s32.totalorder %s22, 1
      %p113 = por %p111, %p112
      %p115 = scmp.ne.s32.totalorder %s98, %s114
      %p116 = scmp.eq.s32.totalorder %s22, 0
      %p117 = por %p115, %p116
      %p118 = scmp.le.s32.totalorder 1, %s16
      %p119 = scmp.lt.s32.totalorder %s16, 3
      %p120 = pnand %p118, %p119
      %p121 = pneg %p120
      // Predicated region
      $region9: #{tpu_custom_call.1} parent=5 // pred_check
        _
      $region10: #{tpu_custom_call.1} parent=5 // pred_check_branch
        %123 = sbr.rel (%p120) target = $region12
      $region11: #{tpu_custom_call.1} parent=5 // pred_region
        %s124 = ssub.s32 %s16, 1
        // Predicated region
        $region13: #{tpu_custom_call.1} parent=11 // pred_check
          %p125 = pneg %p63
        $region14: #{tpu_custom_call.1} parent=11 // pred_check_branch
          %127 = sbr.rel (%p125) target = $region16
        $region15: #{tpu_custom_call.1} parent=11 // pred_region
          %s129 = ssub.s32 1024, 1024
          %130 = vsyncadd [#allocation6], %s129
          %s131 = sshll.u32 [#allocation5], 4
          %s132 = int_to_ptr.vmem [resolvable:$true] %s131
          %137 = dma.hbm_to_vmem [thread:$0]  %s1, 1024, %s132, [#allocation6], 128, 128, 8
        $region16: #{tpu_custom_call.1} parent=11 // pred_fallthru
          _
        // Predicated region
        $region17: #{tpu_custom_call.1} parent=11 // pred_check
          %p138 = pneg %p84
        $region18: #{tpu_custom_call.1} parent=11 // pred_check_branch
          %140 = sbr.rel (%p138) target = $region20
        $region19: #{tpu_custom_call.1} parent=11 // pred_region
          _
        $region20: #{tpu_custom_call.1} parent=11 // pred_fallthru
          _
      $region12: #{tpu_custom_call.1} parent=5 // pred_fallthru
        _
      %p141 = scmp.lt.s32.totalorder %s16, 2
      // Predicated region
      $region21: #{tpu_custom_call.1} parent=5 // pred_check
        %p142 = pneg %p141
      $region22: #{tpu_custom_call.1} parent=5 // pred_check_branch
        %144 = sbr.rel (%p142) target = $region24
      $region23: #{tpu_custom_call.1} parent=5 // pred_region
        // Predicated region
        $region25: #{tpu_custom_call.1} parent=23 // pred_check
          %p145 = pneg %p36
        $region26: #{tpu_custom_call.1} parent=23 // pred_check_branch
          %147 = sbr.rel (%p145) target = $region28
        $region27: #{tpu_custom_call.1} parent=23 // pred_region
          %s148 = sand.u32 %s26, 1
          %s149 = scalar_lea.sflag [#allocation3], %s148
          %s150 = sand.u32 %s26, 1
          %s151 = smul.addr %s150, 8
          %s152 = scalar_lea.vmem [#allocation2], %s151
          %s154 = ssub.s32 128, 128
          %155 = vsyncadd %s149, %s154
          %s156 = smul.addr %s16, 128
          %s157 = scalar_lea.hbm %s0, %s156
          %s159 = sshll.u32 %s152, 4
          %s160 = int_to_ptr.vmem [resolvable:$true] %s159
          %162 = dma.hbm_to_vmem [thread:$0]  %s157, 128, %s160, %s149
        $region28: #{tpu_custom_call.1} parent=23 // pred_fallthru
          _
      $region24: #{tpu_custom_call.1} parent=5 // pred_fallthru
        _
      %p163 = scmp.le.s32.totalorder 1, %s16
      %p164 = scmp.lt.s32.totalorder %s16, 3
      %p165 = pnand %p163, %p164
      %p166 = pneg %p165
      // Predicated region
      $region29: #{tpu_custom_call.1} parent=5 // pred_check
        _
      $region30: #{tpu_custom_call.1} parent=5 // pred_check_branch
        %168 = sbr.rel (%p165) target = $region32
      $region31: #{tpu_custom_call.1} parent=5 // pred_region
        %s169 = ssub.s32 %s16, 1
        %s170 = sand.u32 %s29, 1
        %s171 = scalar_lea.sflag [#allocation3], %s170
        %s172 = sand.u32 %s29, 1
        %s173 = smul.addr %s172, 8
        %s174 = scalar_lea.vmem [#allocation2], %s173
        // Predicated region
        $region33: #{tpu_custom_call.1} parent=31 // pred_check
          %p175 = pneg %p42
        $region34: #{tpu_custom_call.1} parent=31 // pred_check_branch
          %177 = sbr.rel (%p175) target = $region36
        $region35: #{tpu_custom_call.1} parent=31 // pred_region
          %178 = dma.done %s171, 128
        $region36: #{tpu_custom_call.1} parent=31 // pred_fallthru
          _
        // Predicated region
        $region37: #{tpu_custom_call.1} parent=31 // pred_check
          %p179 = pneg %p63
        $region38: #{tpu_custom_call.1} parent=31 // pred_check_branch
          %181 = sbr.rel (%p179) target = $region40
        $region39: #{tpu_custom_call.1} parent=31 // pred_region
          %182 = dma.done [#allocation6], 1024
        $region40: #{tpu_custom_call.1} parent=31 // pred_fallthru
          _
        %s183 = sand.u32 %s29, 1
        %s184 = scalar_lea.sflag [#allocation3], %s183
        %s185 = sand.u32 %s29, 1
        %s186 = smul.addr %s185, 8
        %s187 = scalar_lea.vmem [#allocation2], %s186
        %p188 = pneg %p42
        %p189 = pneg %p39
        %p190 = pneg %p63
        %p191 = pneg %p60
        %p192 = pneg %p84
        %p193 = pneg %p81
        %p194 = pneg %p110
        %p195 = pneg %p107
        %s196 = sand.u32 %s97, 1
        %s197 = scalar_lea.sflag [#allocation4], %s196
        %s198 = sand.u32 %s97, 1
        %s199 = smul.addr %s198, 8
        %s200 = scalar_lea.vmem [#allocation7], %s199
        %v201 = vld [vmem:[%s174] sm:$0xff]
        %v202 = vld [vmem:[#allocation5] sm:$0xff]
        %v203 = vld [vmem:[#allocation5 + $0x8] sm:$0xff]
        %v204 = vld [vmem:[#allocation5 + $0x10] sm:$0xff]
        %v205 = vld [vmem:[#allocation5 + $0x18] sm:$0xff]
        %v206 = vld [vmem:[#allocation5 + $0x20] sm:$0xff]
        %v207 = vld [vmem:[#allocation5 + $0x28] sm:$0xff]
        %v208 = vld [vmem:[#allocation5 + $0x30] sm:$0xff]
        %v209 = vld [vmem:[#allocation5 + $0x38] sm:$0xff]
        %v210 = vld [vmem:[%s2] sm:$0x1]
        %v212 = vlaneseq
        %v213 = vshrl.u32 %v212, 7
        %v214 = vsub.s32 0, %v213
        %v215 = vrot.slane %v210, %v214
        %vm217 = vcmask 523264
        %v219 = vsel %vm217, %v201, 0
        %221 = vmatprep.subr.mxu0 0.0
        %222 = vmatpush1.msra.mxu0 %v202
        %223 = vmatprep.subr.mxu0 0.0
        %224 = vmatpush1.msra.mxu0 %v203
        %225 = vmatprep.subr.mxu0 0.0
        %226 = vmatpush1.msra.mxu0 %v204
        %227 = vmatprep.subr.mxu0 0.0
        %228 = vmatpush1.msra.mxu0 %v205
        %229 = vmatprep.subr.mxu0 0.0
        %230 = vmatpush1.msra.mxu0 %v206
        %231 = vmatprep.subr.mxu0 0.0
        %232 = vmatpush1.msra.mxu0 %v207
        %233 = vmatprep.subr.mxu0 0.0
        %234 = vmatpush1.msra.mxu0 %v208
        %235 = vmatprep.subr.mxu0 0.0
        %236 = vmatpush1.msra.mxu0 %v209
        %237 = vmatprep.subr.mxu0 0.0
        %238 = vmatpush1.msra.mxu0 0.0
        %239 = vmatprep.subr.mxu0 0.0
        %240 = vmatpush1.msra.mxu0 0.0
        %241 = vmatprep.subr.mxu0 0.0
        %242 = vmatpush1.msra.mxu0 0.0
        %243 = vmatprep.subr.mxu0 0.0
        %244 = vmatpush1.msra.mxu0 0.0
        %245 = vmatprep.subr.mxu0 0.0
        %246 = vmatpush1.msra.mxu0 0.0
        %247 = vmatprep.subr.mxu0 0.0
        %248 = vmatpush1.msra.mxu0 0.0
        %249 = vmatprep.subr.mxu0 0.0
        %250 = vmatpush1.msra.mxu0 0.0
        %251 = vmatprep.subr.mxu0 0.0
        %252 = vmatpush1.msra.mxu0 0.0
        %253 = vmatprep.subr.mxu0 0.0
        %254 = vmatpush1.msra.mxu0 0.0
        %255 = vmatprep.subr.mxu0 0.0
        %256 = vmatpush1.msra.mxu0 0.0
        %257 = vmatprep.subr.mxu0 0.0
        %258 = vmatpush1.msra.mxu0 0.0
        %259 = vmatprep.subr.mxu0 0.0
        %260 = vmatpush1.msra.mxu0 0.0
        %261 = vmatprep.subr.mxu0 0.0
        %262 = vmatpush1.msra.mxu0 0.0
        %263 = vmatprep.subr.mxu0 0.0
        %264 = vmatpush1.msra.mxu0 0.0
        %265 = vmatprep.subr.mxu0 0.0
        %266 = vmatpush1.msra.mxu0 0.0
        %267 = vmatprep.subr.mxu0 0.0
        %268 = vmatpush1.msra.mxu0 0.0
        %269 = vmatprep.subr.mxu0 0.0
        %270 = vmatpush1.msra.mxu0 0.0
        %271 = vmatprep.subr.mxu0 0.0
        %272 = vmatpush1.msra.mxu0 0.0
        %273 = vmatprep.subr.mxu0 0.0
        %274 = vmatpush1.msra.mxu0 0.0
        %275 = vmatprep.subr.mxu0 0.0
        %276 = vmatpush1.msra.mxu0 0.0
        %277 = vmatprep.subr.mxu0 0.0
        %278 = vmatpush1.msra.mxu0 0.0
        %279 = vmatprep.subr.mxu0 0.0
        %280 = vmatpush1.msra.mxu0 0.0
        %281 = vmatprep.subr.mxu0 0.0
        %282 = vmatpush1.msra.mxu0 0.0
        %283 = vmatprep.subr.mxu0 0.0
        %284 = vmatpush1.msra.mxu0 0.0
        %285 = vmatprep.mubr.f32.mxu0 0.0
        %286 = vmatmul.mubr.f32.gmra.mrb[0].mxu0 %v219
        %v287 = vpop.f32.mrb[0].mxu0
        %v288 = vadd.f32 %v215, %v287
        %v289 = vpop.f32.mrb[0].mxu0
        %290 = vdwg.mxu0
        %291 = vst [vmem:[%s200] sm:$0xff] %v288
        %s292 = sand.u32 %s97, 1
        %s293 = scalar_lea.sflag [#allocation4], %s292
        %s294 = sand.u32 %s97, 1
        %s295 = smul.addr %s294, 8
        %s296 = scalar_lea.vmem [#allocation7], %s295
        // Predicated region
        $region41: #{tpu_custom_call.1} parent=31 // pred_check
          %p297 = pneg %p107
        $region42: #{tpu_custom_call.1} parent=31 // pred_check_branch
          %299 = sbr.rel (%p297) target = $region44
        $region43: #{tpu_custom_call.1} parent=31 // pred_region
          %s301 = ssub.s32 128, 128
          %302 = vsyncadd %s293, %s301
          %s303 = smul.addr %s21, 128
          %s304 = scalar_lea.hbm %s3, %s303
          %s306 = sshll.u32 %s296, 4
          %s307 = int_to_ptr.vmem [resolvable:$true] %s306
          %309 = dma.vmem_to_hbm [thread:$0]  %s307, 128, %s304, %s293
        $region44: #{tpu_custom_call.1} parent=31 // pred_fallthru
          _
      $region32: #{tpu_custom_call.1} parent=5 // pred_fallthru
        _
      %p310 = scmp.le.s32.totalorder 2, %s16
      // Predicated region
      $region45: #{tpu_custom_call.1} parent=5 // pred_check
        %p311 = pneg %p310
      $region46: #{tpu_custom_call.1} parent=5 // pred_check_branch
        %313 = sbr.rel (%p311) target = $region48
      $region47: #{tpu_custom_call.1} parent=5 // pred_region
        %s314 = ssub.s32 %s16, 2
        // Predicated region
        $region49: #{tpu_custom_call.1} parent=47 // pred_check
          %p315 = pneg %p113
        $region50: #{tpu_custom_call.1} parent=47 // pred_check_branch
          %317 = sbr.rel (%p315) target = $region52
        $region51: #{tpu_custom_call.1} parent=47 // pred_region
          %s318 = sand.u32 %s98, 1
          %s319 = scalar_lea.sflag [#allocation4], %s318
          %s320 = sand.u32 %s98, 1
          %s321 = smul.addr %s320, 8
          %s322 = scalar_lea.vmem [#allocation7], %s321
          %323 = dma.done %s319, 128
        $region52: #{tpu_custom_call.1} parent=47 // pred_fallthru
          _
      $region48: #{tpu_custom_call.1} parent=5 // pred_fallthru
        _
    $region6: #{tpu_custom_call.1} parent=1 // loop_footer
      %s20 = sadd.s32 1, %s16
    $region7: #{tpu_custom_call.1} parent=1 // loop_footer_branch
      %15 = sbr.rel target = $region3
    $region8: #{tpu_custom_call.1} parent=1 // loop_exit
      _
    %324 = vsyncpa [#allocation3], 1
    %s325 = scalar_lea.sflag [#allocation3], 1
    %326 = vsyncpa %s325, 1
    %327 = vsyncpa [#allocation6], 1
    %328 = vsyncpa [#allocation4], 1
    %s329 = scalar_lea.sflag [#allocation4], 1
    %330 = vsyncpa %s329, 1

</llo_original>
